<compile_context>
chip_gen: v7x
topology: tpu7x:2x2x1
jax: 0.10.0
libtpu: 0.0.40
codegen_flags: <defaults>
</compile_context>

<pallas_src>
import math

import jax
import jax.numpy as jnp
from jax import lax
from jax.experimental import pallas as pl
from jax.experimental.pallas import tpu as pltpu

# ---------------- CONFIG (small, deterministic, consistent with the module) --
B = 8                 # batch
INPUT_SIZE = 12       # 4 real + 2 binary + two 3-way one-hot categoricals
ZDIM = 8
HID = 32              # arch = [[32],[32,32],[32,32],[32,32],[32, out]]
N_REAL = 4
HEAD_DIM = 16         # decoder output_dim: [mu_g 4 | logstd_g 4 | bin 2 | cat 3 | cat 3]

BETA = 0.01
GAMMA = 0.01
LN_EPS = 1e-5
INV_SQRT2 = 0.7071067811865476
LOG_2PI = 1.8378770664093453

# ---------------- packed parameter slab (bf16, 32 lanes, 16-aligned rows) ----
SLAB_LANES = 32
ROW_ALIGN = 16        # bf16 sublane tile is 16 rows -> keep every block aligned
PARAM_LAYOUT = [
    # encoder
    ("we1", (INPUT_SIZE, HID)), ("be1", (1, HID)),
    ("we2", (HID, HID)),        ("be2", (1, HID)),
    ("we5", (HID, 2 * ZDIM)),   ("be5", (1, 2 * ZDIM)),   # fused mu|logsigma head
    # decoder
    ("wd1", (ZDIM, HID)),       ("bd1", (1, HID)),
    ("wd2", (HID, HID)),        ("bd2", (1, HID)),
    ("wd5", (HID, HEAD_DIM)),   ("bd5", (1, HEAD_DIM)),   # fused 5-head output
]

OFF, DIM = {}, {}
_row = 0
for _name, (_r, _c) in PARAM_LAYOUT:
    OFF[_name] = _row
    DIM[_name] = (_r, _c)
    _row += ((_r + ROW_ALIGN - 1) // ROW_ALIGN) * ROW_ALIGN
SLAB_ROWS = _row      # 256 rows x 32 lanes bf16 = 16 KiB


# ---------------- in-kernel math helpers ------------------------------------
def _erf(x):
    # Abramowitz & Stegun 7.1.26 polynomial approximation of erf.
    a1, a2, a3, a4, a5 = 0.254829592, -0.284496736, 1.421413741, -1.453152027, 1.061405429
    p = 0.3275911
    ax = jnp.abs(x)
    t = 1.0 / (1.0 + p * ax)
    poly = ((((a5 * t + a4) * t + a3) * t + a2) * t + a1) * t
    y = 1.0 - poly * jnp.exp(-ax * ax)
    return jnp.where(x >= 0.0, y, -y)


def _gelu(x):
    # exact (erf-based) GELU, matching nn.GELU() default
    return 0.5 * x * (1.0 + _erf(x * INV_SQRT2))


def _layernorm(x):
    # nn.LayerNorm(HID) with default gamma=1, beta=0; rsqrt -> EUP slot
    mean = jnp.mean(x, axis=1, keepdims=True)
    c = x - mean
    var = jnp.mean(c * c, axis=1, keepdims=True)
    return c * lax.rsqrt(var + LN_EPS)


def _softplus(v):
    # numerically stable softplus: max(v,0) + log(1 + exp(-|v|))
    return jnp.maximum(v, 0.0) + jnp.log(1.0 + jnp.exp(-jnp.abs(v)))


# ---------------- the fused VAE-forward kernel -------------------------------
def vae_loss_kernel(x_ref, eps_ref, tgt_ref, p_ref, out_ref):
    bf16 = jnp.bfloat16
    x = x_ref[...]                        # (B, 12) f32 (encoder input)
    eps = eps_ref[...]                    # (B, ZDIM) f32
    tgt = tgt_ref[...]                    # (B, 16) f32, pre-aligned targets

    def lin(h_f32, wn, bn):
        # bf16 weights straight from the slab, bf16 activations, f32 accumulate
        wr, wc = DIM[wn]
        w = p_ref[OFF[wn]:OFF[wn] + wr, 0:wc]                 # bf16
        b = p_ref[OFF[bn]:OFF[bn] + 1, 0:wc].astype(jnp.float32)
        return jnp.dot(h_f32.astype(bf16), w,
                       preferred_element_type=jnp.float32) + b

    # ---- Encoder (body1 -> body2 -> body5; body3/4 unused in forward) ----
    h = _gelu(_layernorm(lin(x, "we1", "be1")))
    h = _gelu(_layernorm(lin(h, "we2", "be2")))
    sc = lin(h, "we5", "be5")                      # (B, 16) fused [mu | logsigma]
    mu = sc[:, 0:ZDIM]
    logstd = sc[:, ZDIM:2 * ZDIM]
    std = jnp.exp(logstd)
    z = mu + std * eps                             # rsample

    # ---- Decoder (body1 -> body2 -> body5 fused heads) ----
    d = _gelu(_layernorm(lin(z, "wd1", "bd1")))
    d = _gelu(_layernorm(lin(d, "wd2", "bd2")))
    hd = lin(d, "wd5", "bd5")                      # (B, 16) fused head output

    # static lane slices of the single fused result (no extra MXU round-trips)
    mu_g = hd[:, 0:4]                              # gaussian mu
    lsg = hd[:, 4:8]                               # gaussian log-std
    logit_b = hd[:, 8:10]                          # bernoulli logits
    lc1 = hd[:, 10:13]                             # categorical 1 logits
    lc2 = hd[:, 13:16]                             # categorical 2 logits

    x_g = tgt[:, 0:4]                              # real targets
    t_b = tgt[:, 8:10]                             # (sign(x_bin)+1)/2, precomputed
    oh1 = tgt[:, 10:13]                            # one-hot targets
    oh2 = tgt[:, 13:16]

    # ---- Gaussian (real) head: RE = sum log N(x_real; mu_g, exp(lsg)) ----
    diff = x_g - mu_g
    logp = -lsg - 0.5 * LOG_2PI - 0.5 * diff * diff * jnp.exp(-2.0 * lsg)
    re_col = jnp.sum(logp, axis=1, keepdims=True)              # (B, 1)

    # ---- Bernoulli head: BCE (reduction='sum'), stable softplus form ----
    bce = t_b * _softplus(-logit_b) + (1.0 - t_b) * _softplus(logit_b)
    bc_col = jnp.sum(bce, axis=1, keepdims=True)                # (B, 1)

    # ---- KL term: log q(z|x) - log p(z); (z - mu)/std == eps analytically ----
    kl = -logstd - 0.5 * eps * eps + 0.5 * z * z
    kl_col = jnp.sum(kl, axis=1, keepdims=True)                 # (B, 1)

    # ---- Categorical heads: cross entropy vs one-hot targets (sum) ----
    def ce(logits, onehot):
        m = jnp.max(logits, axis=1, keepdims=True)
        lse = jnp.log(jnp.sum(jnp.exp(logits - m), axis=1, keepdims=True)) + m
        picked = jnp.sum(logits * onehot, axis=1, keepdims=True)
        return lse - picked                                     # (B, 1)

    mc_col = ce(lc1, oh1) + ce(lc2, oh2)

    # ---- single pre-scaled per-sample column, ONE final reduction ----
    per_sample = (kl_col - re_col) * (1.0 / float(B)) + BETA * bc_col + GAMMA * mc_col
    out_ref[...] = jnp.sum(per_sample, axis=0, keepdims=True)   # (1, 1)


# ---------------- wrapper -----------------------------------------------------
def vae_forward(x, eps, tgt, param_slab):
    # Single-shot kernel: no grid, whole arrays resident in VMEM (one DMA each;
    # slab is ~16 KiB bf16). Scalar (1,1) VMEM output kept knowingly.
    vmem = pl.BlockSpec(memory_space=pltpu.MemorySpace.VMEM)
    return pl.pallas_call(
        vae_loss_kernel,
        out_shape=jax.ShapeDtypeStruct((1, 1), jnp.float32),
        in_specs=[vmem, vmem, vmem, vmem],
        out_specs=vmem,
    )(x, eps, tgt, param_slab)
    # TODO(synk): for production batches (v7x), add a batch grid axis with
    # dimension_semantics=("parallel",), keep the slab un-blocked (constant
    # index_map) so it stays VMEM-resident, and size tiles for 64 MiB VMEM.
    # TODO(synk): if called in a loop, hide the slab DMA via cross-call
    # prefetch (return DMA semaphore + VMEM ref, has_side_effects=True).


def pack_params(named):
    slab = jnp.zeros((SLAB_ROWS, SLAB_LANES), jnp.bfloat16)
    for name, arr in named.items():
        r, c = DIM[name]
        blk = jnp.asarray(arr, jnp.float32).reshape(r, c).astype(jnp.bfloat16)
        slab = slab.at[OFF[name]:OFF[name] + r, :c].set(blk)
    return slab


def xavier_linear(key, fan_in, fan_out):
    # matches torch.nn.init.xavier_uniform_ bound; stored as (in, out) so the
    # kernel does x @ W + b; bias zeroed (matches weights_init).
    bound = math.sqrt(6.0 / (fan_in + fan_out))
    w = jax.random.uniform(key, (fan_in, fan_out), jnp.float32, -bound, bound)
    b = jnp.zeros((1, fan_out), jnp.float32)
    return w, b


if __name__ == "__main__":
    key = jax.random.PRNGKey(0)
    ks = jax.random.split(key, 12)

    # ---- deterministic input x = [4 real | 2 binary | one-hot(3) | one-hot(3)]
    x_real = jax.random.normal(ks[0], (B, 4), jnp.float32)
    x_bin = jax.random.normal(ks[1], (B, 2), jnp.float32)
    cat1 = jax.random.randint(ks[2], (B,), 0, 3)
    cat2 = jax.random.randint(ks[3], (B,), 0, 3)
    oh1 = jax.nn.one_hot(cat1, 3, dtype=jnp.float32)
    oh2 = jax.nn.one_hot(cat2, 3, dtype=jnp.float32)
    x = jnp.concatenate([x_real, x_bin, oh1, oh2], axis=1)       # (B, 12)
    eps = jax.random.normal(ks[4], (B, ZDIM), jnp.float32)       # reparam noise

    # targets packed to the fused decoder-head lane layout:
    # [real 0:4 | pad 4:8 | bernoulli-t 8:10 | one-hot 10:13 | one-hot 13:16]
    t_bin = (jnp.sign(x_bin) + 1.0) * 0.5          # torch (sign(x)+1)/2, sign(0)=0 -> 0.5
    tgt = jnp.concatenate([x_real, jnp.zeros((B, 4), jnp.float32), t_bin, oh1, oh2],
                          axis=1)                                # (B, 16)

    # ---- parameters (only the layers used by forward: body1, body2, body5) ----
    we1, be1 = xavier_linear(ks[5], INPUT_SIZE, HID)     # encoder body1
    we2, be2 = xavier_linear(ks[6], HID, HID)            # encoder body2
    we5, be5 = xavier_linear(ks[7], HID, 2 * ZDIM)       # encoder body5 (mu|logsigma fused)
    wd1, bd1 = xavier_linear(ks[8], ZDIM, HID)           # decoder body1
    wd2, bd2 = xavier_linear(ks[9], HID, HID)            # decoder body2
    wd5, bd5 = xavier_linear(ks[10], HID, HEAD_DIM)      # decoder body5 (all heads fused)

    named = {
        "we1": we1, "be1": be1, "we2": we2, "be2": be2, "we5": we5, "be5": be5,
        "wd1": wd1, "bd1": bd1, "wd2": wd2, "bd2": bd2, "wd5": wd5, "bd5": bd5,
    }
    param_slab = pack_params(named)                      # (256, 32) bf16, one ~16 KiB DMA

    # TODO(synk): nn.Dropout layers are omitted (dropout config = 0); torch
    # Distribution objects are replaced by closed-form log-prob arithmetic;
    # body3/body4 are constructed but unused by the module's forward.

    loss = vae_forward(x, eps, tgt, param_slab)
    jax.block_until_ready(loss)
    assert loss.shape == (1, 1) and jnp.isfinite(loss).all()
    print("KERNEL_OK")
</pallas_src>

<mosaic_0001>
module attributes {stable_mosaic.version = 11 : i64} {
  func.func @vae_loss_kernel(%arg0: memref<8x12xf32, #tpu.memory_space<vmem>>, %arg1: memref<8x8xf32, #tpu.memory_space<vmem>>, %arg2: memref<8x16xf32, #tpu.memory_space<vmem>>, %arg3: memref<256x32xbf16, #tpu.memory_space<vmem>>, %arg4: memref<1x1xf32, #tpu.memory_space<vmem>>) attributes {dimension_semantics = [], scalar_prefetch = 0 : i64, scratch_operands = 0 : i64, tpu.core_type = #tpu.core_type<tc>} {
    %c0 = arith.constant 0 : index
    %c0_0 = arith.constant 0 : index
    %0 = vector.load %arg0[%c0, %c0_0] : memref<8x12xf32, #tpu.memory_space<vmem>>, vector<8x12xf32>
    %c0_1 = arith.constant 0 : index
    %c0_2 = arith.constant 0 : index
    %1 = vector.load %arg1[%c0_1, %c0_2] : memref<8x8xf32, #tpu.memory_space<vmem>>, vector<8x8xf32>
    %c0_3 = arith.constant 0 : index
    %c0_4 = arith.constant 0 : index
    %2 = vector.load %arg2[%c0_3, %c0_4] : memref<8x16xf32, #tpu.memory_space<vmem>>, vector<8x16xf32>
    %c0_5 = arith.constant 0 : index
    %c0_6 = arith.constant 0 : index
    %3 = vector.load %arg3[%c0_5, %c0_6] : memref<256x32xbf16, #tpu.memory_space<vmem>>, vector<12x32xbf16>
    %c16 = arith.constant 16 : index
    %c0_7 = arith.constant 0 : index
    %4 = vector.load %arg3[%c16, %c0_7] : memref<256x32xbf16, #tpu.memory_space<vmem>>, vector<1x32xbf16>
    %5 = arith.extf %4 : vector<1x32xbf16> to vector<1x32xf32>
    %6 = arith.truncf %0 : vector<8x12xf32> to vector<8x12xbf16>
    %cst = arith.constant dense<0.000000e+00> : vector<8x32xf32>
    %7 = tpu.matmul %6, %3, %cst {dimension_numbers = #tpu.dot_dimension_numbers<[1], [0], [0], [1], [0, 0, 1, 1], [], []>} : vector<8x12xbf16>, vector<12x32xbf16>, vector<8x32xf32> -> vector<8x32xf32>
    %8 = vector.broadcast %5 : vector<1x32xf32> to vector<8x32xf32>
    %9 = arith.addf %7, %8 : vector<8x32xf32>
    %cst_8 = arith.constant dense<0.000000e+00> : vector<8xf32>
    %10 = vector.multi_reduction <add>, %9, %cst_8 [1] : vector<8x32xf32> to vector<8xf32>
    %11 = vector.shape_cast %10 : vector<8xf32> to vector<8x1xf32>
    %cst_9 = arith.constant 3.200000e+01 : f32
    %12 = vector.broadcast %cst_9 : f32 to vector<8x1xf32>
    %13 = arith.divf %11, %12 : vector<8x1xf32>
    %14 = vector.broadcast %13 : vector<8x1xf32> to vector<8x32xf32>
    %15 = arith.subf %9, %14 : vector<8x32xf32>
    %16 = arith.mulf %15, %15 : vector<8x32xf32>
    %cst_10 = arith.constant dense<0.000000e+00> : vector<8xf32>
    %17 = vector.multi_reduction <add>, %16, %cst_10 [1] : vector<8x32xf32> to vector<8xf32>
    %18 = vector.shape_cast %17 : vector<8xf32> to vector<8x1xf32>
    %cst_11 = arith.constant 3.200000e+01 : f32
    %19 = vector.broadcast %cst_11 : f32 to vector<8x1xf32>
    %20 = arith.divf %18, %19 : vector<8x1xf32>
    %cst_12 = arith.constant 9.99999974E-6 : f32
    %21 = vector.broadcast %cst_12 : f32 to vector<8x1xf32>
    %22 = arith.addf %20, %21 : vector<8x1xf32>
    %23 = math.rsqrt %22 : vector<8x1xf32>
    %24 = vector.broadcast %23 : vector<8x1xf32> to vector<8x32xf32>
    %25 = arith.mulf %15, %24 : vector<8x32xf32>
    %cst_13 = arith.constant 5.000000e-01 : f32
    %26 = vector.broadcast %cst_13 : f32 to vector<8x32xf32>
    %27 = arith.mulf %26, %25 : vector<8x32xf32>
    %cst_14 = arith.constant 0.707106769 : f32
    %28 = vector.broadcast %cst_14 : f32 to vector<8x32xf32>
    %29 = arith.mulf %25, %28 : vector<8x32xf32>
    %30 = math.absf %29 : vector<8x32xf32>
    %cst_15 = arith.constant 0.327591091 : f32
    %31 = vector.broadcast %cst_15 : f32 to vector<8x32xf32>
    %32 = arith.mulf %31, %30 : vector<8x32xf32>
    %cst_16 = arith.constant 1.000000e+00 : f32
    %33 = vector.broadcast %cst_16 : f32 to vector<8x32xf32>
    %34 = arith.addf %33, %32 : vector<8x32xf32>
    %cst_17 = arith.constant 1.000000e+00 : f32
    %35 = vector.broadcast %cst_17 : f32 to vector<8x32xf32>
    %36 = arith.divf %35, %34 : vector<8x32xf32>
    %cst_18 = arith.constant 1.06140542 : f32
    %37 = vector.broadcast %cst_18 : f32 to vector<8x32xf32>
    %38 = arith.mulf %37, %36 : vector<8x32xf32>
    %cst_19 = arith.constant -1.45315206 : f32
    %39 = vector.broadcast %cst_19 : f32 to vector<8x32xf32>
    %40 = arith.addf %38, %39 : vector<8x32xf32>
    %41 = arith.mulf %40, %36 : vector<8x32xf32>
    %cst_20 = arith.constant 1.42141378 : f32
    %42 = vector.broadcast %cst_20 : f32 to vector<8x32xf32>
    %43 = arith.addf %41, %42 : vector<8x32xf32>
    %44 = arith.mulf %43, %36 : vector<8x32xf32>
    %cst_21 = arith.constant -0.284496725 : f32
    %45 = vector.broadcast %cst_21 : f32 to vector<8x32xf32>
    %46 = arith.addf %44, %45 : vector<8x32xf32>
    %47 = arith.mulf %46, %36 : vector<8x32xf32>
    %cst_22 = arith.constant 0.254829586 : f32
    %48 = vector.broadcast %cst_22 : f32 to vector<8x32xf32>
    %49 = arith.addf %47, %48 : vector<8x32xf32>
    %50 = arith.mulf %49, %36 : vector<8x32xf32>
    %cst_23 = arith.constant 0.000000e+00 : f32
    %51 = vector.broadcast %cst_23 : f32 to vector<8x32xf32>
    %52 = arith.subf %51, %30 : vector<8x32xf32>
    %53 = arith.mulf %52, %30 : vector<8x32xf32>
    %54 = math.exp %53 : vector<8x32xf32>
    %55 = arith.mulf %50, %54 : vector<8x32xf32>
    %cst_24 = arith.constant 1.000000e+00 : f32
    %56 = vector.broadcast %cst_24 : f32 to vector<8x32xf32>
    %57 = arith.subf %56, %55 : vector<8x32xf32>
    %cst_25 = arith.constant 0.000000e+00 : f32
    %58 = vector.broadcast %cst_25 : f32 to vector<8x32xf32>
    %59 = arith.cmpf oge, %29, %58 : vector<8x32xf32>
    %cst_26 = arith.constant 0.000000e+00 : f32
    %60 = vector.broadcast %cst_26 : f32 to vector<8x32xf32>
    %61 = arith.subf %60, %57 : vector<8x32xf32>
    %62 = arith.select %59, %57, %61 : vector<8x32xi1>, vector<8x32xf32>
    %cst_27 = arith.constant 1.000000e+00 : f32
    %63 = vector.broadcast %cst_27 : f32 to vector<8x32xf32>
    %64 = arith.addf %63, %62 : vector<8x32xf32>
    %65 = arith.mulf %27, %64 : vector<8x32xf32>
    %c32 = arith.constant 32 : index
    %c0_28 = arith.constant 0 : index
    %66 = vector.load %arg3[%c32, %c0_28] : memref<256x32xbf16, #tpu.memory_space<vmem>>, vector<32x32xbf16>
    %c64 = arith.constant 64 : index
    %c0_29 = arith.constant 0 : index
    %67 = vector.load %arg3[%c64, %c0_29] : memref<256x32xbf16, #tpu.memory_space<vmem>>, vector<1x32xbf16>
    %68 = arith.extf %67 : vector<1x32xbf16> to vector<1x32xf32>
    %69 = arith.truncf %65 : vector<8x32xf32> to vector<8x32xbf16>
    %cst_30 = arith.constant dense<0.000000e+00> : vector<8x32xf32>
    %70 = tpu.matmul %69, %66, %cst_30 {dimension_numbers = #tpu.dot_dimension_numbers<[1], [0], [0], [1], [0, 0, 1, 1], [], []>} : vector<8x32xbf16>, vector<32x32xbf16>, vector<8x32xf32> -> vector<8x32xf32>
    %71 = vector.broadcast %68 : vector<1x32xf32> to vector<8x32xf32>
    %72 = arith.addf %70, %71 : vector<8x32xf32>
    %cst_31 = arith.constant dense<0.000000e+00> : vector<8xf32>
    %73 = vector.multi_reduction <add>, %72, %cst_31 [1] : vector<8x32xf32> to vector<8xf32>
    %74 = vector.shape_cast %73 : vector<8xf32> to vector<8x1xf32>
    %cst_32 = arith.constant 3.200000e+01 : f32
    %75 = vector.broadcast %cst_32 : f32 to vector<8x1xf32>
    %76 = arith.divf %74, %75 : vector<8x1xf32>
    %77 = vector.broadcast %76 : vector<8x1xf32> to vector<8x32xf32>
    %78 = arith.subf %72, %77 : vector<8x32xf32>
    %79 = arith.mulf %78, %78 : vector<8x32xf32>
    %cst_33 = arith.constant dense<0.000000e+00> : vector<8xf32>
    %80 = vector.multi_reduction <add>, %79, %cst_33 [1] : vector<8x32xf32> to vector<8xf32>
    %81 = vector.shape_cast %80 : vector<8xf32> to vector<8x1xf32>
    %cst_34 = arith.constant 3.200000e+01 : f32
    %82 = vector.broadcast %cst_34 : f32 to vector<8x1xf32>
    %83 = arith.divf %81, %82 : vector<8x1xf32>
    %cst_35 = arith.constant 9.99999974E-6 : f32
    %84 = vector.broadcast %cst_35 : f32 to vector<8x1xf32>
    %85 = arith.addf %83, %84 : vector<8x1xf32>
    %86 = math.rsqrt %85 : vector<8x1xf32>
    %87 = vector.broadcast %86 : vector<8x1xf32> to vector<8x32xf32>
    %88 = arith.mulf %78, %87 : vector<8x32xf32>
    %cst_36 = arith.constant 5.000000e-01 : f32
    %89 = vector.broadcast %cst_36 : f32 to vector<8x32xf32>
    %90 = arith.mulf %89, %88 : vector<8x32xf32>
    %cst_37 = arith.constant 0.707106769 : f32
    %91 = vector.broadcast %cst_37 : f32 to vector<8x32xf32>
    %92 = arith.mulf %88, %91 : vector<8x32xf32>
    %93 = math.absf %92 : vector<8x32xf32>
    %cst_38 = arith.constant 0.327591091 : f32
    %94 = vector.broadcast %cst_38 : f32 to vector<8x32xf32>
    %95 = arith.mulf %94, %93 : vector<8x32xf32>
    %cst_39 = arith.constant 1.000000e+00 : f32
    %96 = vector.broadcast %cst_39 : f32 to vector<8x32xf32>
    %97 = arith.addf %96, %95 : vector<8x32xf32>
    %cst_40 = arith.constant 1.000000e+00 : f32
    %98 = vector.broadcast %cst_40 : f32 to vector<8x32xf32>
    %99 = arith.divf %98, %97 : vector<8x32xf32>
    %cst_41 = arith.constant 1.06140542 : f32
    %100 = vector.broadcast %cst_41 : f32 to vector<8x32xf32>
    %101 = arith.mulf %100, %99 : vector<8x32xf32>
    %cst_42 = arith.constant -1.45315206 : f32
    %102 = vector.broadcast %cst_42 : f32 to vector<8x32xf32>
    %103 = arith.addf %101, %102 : vector<8x32xf32>
    %104 = arith.mulf %103, %99 : vector<8x32xf32>
    %cst_43 = arith.constant 1.42141378 : f32
    %105 = vector.broadcast %cst_43 : f32 to vector<8x32xf32>
    %106 = arith.addf %104, %105 : vector<8x32xf32>
    %107 = arith.mulf %106, %99 : vector<8x32xf32>
    %cst_44 = arith.constant -0.284496725 : f32
    %108 = vector.broadcast %cst_44 : f32 to vector<8x32xf32>
    %109 = arith.addf %107, %108 : vector<8x32xf32>
    %110 = arith.mulf %109, %99 : vector<8x32xf32>
    %cst_45 = arith.constant 0.254829586 : f32
    %111 = vector.broadcast %cst_45 : f32 to vector<8x32xf32>
    %112 = arith.addf %110, %111 : vector<8x32xf32>
    %113 = arith.mulf %112, %99 : vector<8x32xf32>
    %cst_46 = arith.constant 0.000000e+00 : f32
    %114 = vector.broadcast %cst_46 : f32 to vector<8x32xf32>
    %115 = arith.subf %114, %93 : vector<8x32xf32>
    %116 = arith.mulf %115, %93 : vector<8x32xf32>
    %117 = math.exp %116 : vector<8x32xf32>
    %118 = arith.mulf %113, %117 : vector<8x32xf32>
    %cst_47 = arith.constant 1.000000e+00 : f32
    %119 = vector.broadcast %cst_47 : f32 to vector<8x32xf32>
    %120 = arith.subf %119, %118 : vector<8x32xf32>
    %cst_48 = arith.constant 0.000000e+00 : f32
    %121 = vector.broadcast %cst_48 : f32 to vector<8x32xf32>
    %122 = arith.cmpf oge, %92, %121 : vector<8x32xf32>
    %cst_49 = arith.constant 0.000000e+00 : f32
    %123 = vector.broadcast %cst_49 : f32 to vector<8x32xf32>
    %124 = arith.subf %123, %120 : vector<8x32xf32>
    %125 = arith.select %122, %120, %124 : vector<8x32xi1>, vector<8x32xf32>
    %cst_50 = arith.constant 1.000000e+00 : f32
    %126 = vector.broadcast %cst_50 : f32 to vector<8x32xf32>
    %127 = arith.addf %126, %125 : vector<8x32xf32>
    %128 = arith.mulf %90, %127 : vector<8x32xf32>
    %c80 = arith.constant 80 : index
    %c0_51 = arith.constant 0 : index
    %129 = vector.load %arg3[%c80, %c0_51] : memref<256x32xbf16, #tpu.memory_space<vmem>>, vector<32x16xbf16>
    %c112 = arith.constant 112 : index
    %c0_52 = arith.constant 0 : index
    %130 = vector.load %arg3[%c112, %c0_52] : memref<256x32xbf16, #tpu.memory_space<vmem>>, vector<1x16xbf16>
    %131 = arith.extf %130 : vector<1x16xbf16> to vector<1x16xf32>
    %132 = arith.truncf %128 : vector<8x32xf32> to vector<8x32xbf16>
    %cst_53 = arith.constant dense<0.000000e+00> : vector<8x16xf32>
    %133 = tpu.matmul %132, %129, %cst_53 {dimension_numbers = #tpu.dot_dimension_numbers<[1], [0], [0], [1], [0, 0, 1, 1], [], []>} : vector<8x32xbf16>, vector<32x16xbf16>, vector<8x16xf32> -> vector<8x16xf32>
    %134 = vector.broadcast %131 : vector<1x16xf32> to vector<8x16xf32>
    %135 = arith.addf %133, %134 : vector<8x16xf32>
    %136 = vector.extract_strided_slice %135 {offsets = [0, 0], sizes = [8, 8], strides = [1, 1]} : vector<8x16xf32> to vector<8x8xf32>
    %137 = vector.extract_strided_slice %135 {offsets = [0, 8], sizes = [8, 8], strides = [1, 1]} : vector<8x16xf32> to vector<8x8xf32>
    %138 = math.exp %137 : vector<8x8xf32>
    %139 = arith.mulf %138, %1 : vector<8x8xf32>
    %140 = arith.addf %136, %139 : vector<8x8xf32>
    %c128 = arith.constant 128 : index
    %c0_54 = arith.constant 0 : index
    %141 = vector.load %arg3[%c128, %c0_54] : memref<256x32xbf16, #tpu.memory_space<vmem>>, vector<8x32xbf16>
    %c144 = arith.constant 144 : index
    %c0_55 = arith.constant 0 : index
    %142 = vector.load %arg3[%c144, %c0_55] : memref<256x32xbf16, #tpu.memory_space<vmem>>, vector<1x32xbf16>
    %143 = arith.extf %142 : vector<1x32xbf16> to vector<1x32xf32>
    %144 = arith.truncf %140 : vector<8x8xf32> to vector<8x8xbf16>
    %cst_56 = arith.constant dense<0.000000e+00> : vector<8x32xf32>
    %145 = tpu.matmul %144, %141, %cst_56 {dimension_numbers = #tpu.dot_dimension_numbers<[1], [0], [0], [1], [0, 0, 1, 1], [], []>} : vector<8x8xbf16>, vector<8x32xbf16>, vector<8x32xf32> -> vector<8x32xf32>
    %146 = vector.broadcast %143 : vector<1x32xf32> to vector<8x32xf32>
    %147 = arith.addf %145, %146 : vector<8x32xf32>
    %cst_57 = arith.constant dense<0.000000e+00> : vector<8xf32>
    %148 = vector.multi_reduction <add>, %147, %cst_57 [1] : vector<8x32xf32> to vector<8xf32>
    %149 = vector.shape_cast %148 : vector<8xf32> to vector<8x1xf32>
    %cst_58 = arith.constant 3.200000e+01 : f32
    %150 = vector.broadcast %cst_58 : f32 to vector<8x1xf32>
    %151 = arith.divf %149, %150 : vector<8x1xf32>
    %152 = vector.broadcast %151 : vector<8x1xf32> to vector<8x32xf32>
    %153 = arith.subf %147, %152 : vector<8x32xf32>
    %154 = arith.mulf %153, %153 : vector<8x32xf32>
    %cst_59 = arith.constant dense<0.000000e+00> : vector<8xf32>
    %155 = vector.multi_reduction <add>, %154, %cst_59 [1] : vector<8x32xf32> to vector<8xf32>
    %156 = vector.shape_cast %155 : vector<8xf32> to vector<8x1xf32>
    %cst_60 = arith.constant 3.200000e+01 : f32
    %157 = vector.broadcast %cst_60 : f32 to vector<8x1xf32>
    %158 = arith.divf %156, %157 : vector<8x1xf32>
    %cst_61 = arith.constant 9.99999974E-6 : f32
    %159 = vector.broadcast %cst_61 : f32 to vector<8x1xf32>
    %160 = arith.addf %158, %159 : vector<8x1xf32>
    %161 = math.rsqrt %160 : vector<8x1xf32>
    %162 = vector.broadcast %161 : vector<8x1xf32> to vector<8x32xf32>
    %163 = arith.mulf %153, %162 : vector<8x32xf32>
    %cst_62 = arith.constant 5.000000e-01 : f32
    %164 = vector.broadcast %cst_62 : f32 to vector<8x32xf32>
    %165 = arith.mulf %164, %163 : vector<8x32xf32>
    %cst_63 = arith.constant 0.707106769 : f32
    %166 = vector.broadcast %cst_63 : f32 to vector<8x32xf32>
    %167 = arith.mulf %163, %166 : vector<8x32xf32>
    %168 = math.absf %167 : vector<8x32xf32>
    %cst_64 = arith.constant 0.327591091 : f32
    %169 = vector.broadcast %cst_64 : f32 to vector<8x32xf32>
    %170 = arith.mulf %169, %168 : vector<8x32xf32>
    %cst_65 = arith.constant 1.000000e+00 : f32
    %171 = vector.broadcast %cst_65 : f32 to vector<8x32xf32>
    %172 = arith.addf %171, %170 : vector<8x32xf32>
    %cst_66 = arith.constant 1.000000e+00 : f32
    %173 = vector.broadcast %cst_66 : f32 to vector<8x32xf32>
    %174 = arith.divf %173, %172 : vector<8x32xf32>
    %cst_67 = arith.constant 1.06140542 : f32
    %175 = vector.broadcast %cst_67 : f32 to vector<8x32xf32>
    %176 = arith.mulf %175, %174 : vector<8x32xf32>
    %cst_68 = arith.constant -1.45315206 : f32
    %177 = vector.broadcast %cst_68 : f32 to vector<8x32xf32>
    %178 = arith.addf %176, %177 : vector<8x32xf32>
    %179 = arith.mulf %178, %174 : vector<8x32xf32>
    %cst_69 = arith.constant 1.42141378 : f32
    %180 = vector.broadcast %cst_69 : f32 to vector<8x32xf32>
    %181 = arith.addf %179, %180 : vector<8x32xf32>
    %182 = arith.mulf %181, %174 : vector<8x32xf32>
    %cst_70 = arith.constant -0.284496725 : f32
    %183 = vector.broadcast %cst_70 : f32 to vector<8x32xf32>
    %184 = arith.addf %182, %183 : vector<8x32xf32>
    %185 = arith.mulf %184, %174 : vector<8x32xf32>
    %cst_71 = arith.constant 0.254829586 : f32
    %186 = vector.broadcast %cst_71 : f32 to vector<8x32xf32>
    %187 = arith.addf %185, %186 : vector<8x32xf32>
    %188 = arith.mulf %187, %174 : vector<8x32xf32>
    %cst_72 = arith.constant 0.000000e+00 : f32
    %189 = vector.broadcast %cst_72 : f32 to vector<8x32xf32>
    %190 = arith.subf %189, %168 : vector<8x32xf32>
    %191 = arith.mulf %190, %168 : vector<8x32xf32>
    %192 = math.exp %191 : vector<8x32xf32>
    %193 = arith.mulf %188, %192 : vector<8x32xf32>
    %cst_73 = arith.constant 1.000000e+00 : f32
    %194 = vector.broadcast %cst_73 : f32 to vector<8x32xf32>
    %195 = arith.subf %194, %193 : vector<8x32xf32>
    %cst_74 = arith.constant 0.000000e+00 : f32
    %196 = vector.broadcast %cst_74 : f32 to vector<8x32xf32>
    %197 = arith.cmpf oge, %167, %196 : vector<8x32xf32>
    %cst_75 = arith.constant 0.000000e+00 : f32
    %198 = vector.broadcast %cst_75 : f32 to vector<8x32xf32>
    %199 = arith.subf %198, %195 : vector<8x32xf32>
    %200 = arith.select %197, %195, %199 : vector<8x32xi1>, vector<8x32xf32>
    %cst_76 = arith.constant 1.000000e+00 : f32
    %201 = vector.broadcast %cst_76 : f32 to vector<8x32xf32>
    %202 = arith.addf %201, %200 : vector<8x32xf32>
    %203 = arith.mulf %165, %202 : vector<8x32xf32>
    %c160 = arith.constant 160 : index
    %c0_77 = arith.constant 0 : index
    %204 = vector.load %arg3[%c160, %c0_77] : memref<256x32xbf16, #tpu.memory_space<vmem>>, vector<32x32xbf16>
    %c192 = arith.constant 192 : index
    %c0_78 = arith.constant 0 : index
    %205 = vector.load %arg3[%c192, %c0_78] : memref<256x32xbf16, #tpu.memory_space<vmem>>, vector<1x32xbf16>
    %206 = arith.extf %205 : vector<1x32xbf16> to vector<1x32xf32>
    %207 = arith.truncf %203 : vector<8x32xf32> to vector<8x32xbf16>
    %cst_79 = arith.constant dense<0.000000e+00> : vector<8x32xf32>
    %208 = tpu.matmul %207, %204, %cst_79 {dimension_numbers = #tpu.dot_dimension_numbers<[1], [0], [0], [1], [0, 0, 1, 1], [], []>} : vector<8x32xbf16>, vector<32x32xbf16>, vector<8x32xf32> -> vector<8x32xf32>
    %209 = vector.broadcast %206 : vector<1x32xf32> to vector<8x32xf32>
    %210 = arith.addf %208, %209 : vector<8x32xf32>
    %cst_80 = arith.constant dense<0.000000e+00> : vector<8xf32>
    %211 = vector.multi_reduction <add>, %210, %cst_80 [1] : vector<8x32xf32> to vector<8xf32>
    %212 = vector.shape_cast %211 : vector<8xf32> to vector<8x1xf32>
    %cst_81 = arith.constant 3.200000e+01 : f32
    %213 = vector.broadcast %cst_81 : f32 to vector<8x1xf32>
    %214 = arith.divf %212, %213 : vector<8x1xf32>
    %215 = vector.broadcast %214 : vector<8x1xf32> to vector<8x32xf32>
    %216 = arith.subf %210, %215 : vector<8x32xf32>
    %217 = arith.mulf %216, %216 : vector<8x32xf32>
    %cst_82 = arith.constant dense<0.000000e+00> : vector<8xf32>
    %218 = vector.multi_reduction <add>, %217, %cst_82 [1] : vector<8x32xf32> to vector<8xf32>
    %219 = vector.shape_cast %218 : vector<8xf32> to vector<8x1xf32>
    %cst_83 = arith.constant 3.200000e+01 : f32
    %220 = vector.broadcast %cst_83 : f32 to vector<8x1xf32>
    %221 = arith.divf %219, %220 : vector<8x1xf32>
    %cst_84 = arith.constant 9.99999974E-6 : f32
    %222 = vector.broadcast %cst_84 : f32 to vector<8x1xf32>
    %223 = arith.addf %221, %222 : vector<8x1xf32>
    %224 = math.rsqrt %223 : vector<8x1xf32>
    %225 = vector.broadcast %224 : vector<8x1xf32> to vector<8x32xf32>
    %226 = arith.mulf %216, %225 : vector<8x32xf32>
    %cst_85 = arith.constant 5.000000e-01 : f32
    %227 = vector.broadcast %cst_85 : f32 to vector<8x32xf32>
    %228 = arith.mulf %227, %226 : vector<8x32xf32>
    %cst_86 = arith.constant 0.707106769 : f32
    %229 = vector.broadcast %cst_86 : f32 to vector<8x32xf32>
    %230 = arith.mulf %226, %229 : vector<8x32xf32>
    %231 = math.absf %230 : vector<8x32xf32>
    %cst_87 = arith.constant 0.327591091 : f32
    %232 = vector.broadcast %cst_87 : f32 to vector<8x32xf32>
    %233 = arith.mulf %232, %231 : vector<8x32xf32>
    %cst_88 = arith.constant 1.000000e+00 : f32
    %234 = vector.broadcast %cst_88 : f32 to vector<8x32xf32>
    %235 = arith.addf %234, %233 : vector<8x32xf32>
    %cst_89 = arith.constant 1.000000e+00 : f32
    %236 = vector.broadcast %cst_89 : f32 to vector<8x32xf32>
    %237 = arith.divf %236, %235 : vector<8x32xf32>
    %cst_90 = arith.constant 1.06140542 : f32
    %238 = vector.broadcast %cst_90 : f32 to vector<8x32xf32>
    %239 = arith.mulf %238, %237 : vector<8x32xf32>
    %cst_91 = arith.constant -1.45315206 : f32
    %240 = vector.broadcast %cst_91 : f32 to vector<8x32xf32>
    %241 = arith.addf %239, %240 : vector<8x32xf32>
    %242 = arith.mulf %241, %237 : vector<8x32xf32>
    %cst_92 = arith.constant 1.42141378 : f32
    %243 = vector.broadcast %cst_92 : f32 to vector<8x32xf32>
    %244 = arith.addf %242, %243 : vector<8x32xf32>
    %245 = arith.mulf %244, %237 : vector<8x32xf32>
    %cst_93 = arith.constant -0.284496725 : f32
    %246 = vector.broadcast %cst_93 : f32 to vector<8x32xf32>
    %247 = arith.addf %245, %246 : vector<8x32xf32>
    %248 = arith.mulf %247, %237 : vector<8x32xf32>
    %cst_94 = arith.constant 0.254829586 : f32
    %249 = vector.broadcast %cst_94 : f32 to vector<8x32xf32>
    %250 = arith.addf %248, %249 : vector<8x32xf32>
    %251 = arith.mulf %250, %237 : vector<8x32xf32>
    %cst_95 = arith.constant 0.000000e+00 : f32
    %252 = vector.broadcast %cst_95 : f32 to vector<8x32xf32>
    %253 = arith.subf %252, %231 : vector<8x32xf32>
    %254 = arith.mulf %253, %231 : vector<8x32xf32>
    %255 = math.exp %254 : vector<8x32xf32>
    %256 = arith.mulf %251, %255 : vector<8x32xf32>
    %cst_96 = arith.constant 1.000000e+00 : f32
    %257 = vector.broadcast %cst_96 : f32 to vector<8x32xf32>
    %258 = arith.subf %257, %256 : vector<8x32xf32>
    %cst_97 = arith.constant 0.000000e+00 : f32
    %259 = vector.broadcast %cst_97 : f32 to vector<8x32xf32>
    %260 = arith.cmpf oge, %230, %259 : vector<8x32xf32>
    %cst_98 = arith.constant 0.000000e+00 : f32
    %261 = vector.broadcast %cst_98 : f32 to vector<8x32xf32>
    %262 = arith.subf %261, %258 : vector<8x32xf32>
    %263 = arith.select %260, %258, %262 : vector<8x32xi1>, vector<8x32xf32>
    %cst_99 = arith.constant 1.000000e+00 : f32
    %264 = vector.broadcast %cst_99 : f32 to vector<8x32xf32>
    %265 = arith.addf %264, %263 : vector<8x32xf32>
    %266 = arith.mulf %228, %265 : vector<8x32xf32>
    %c208 = arith.constant 208 : index
    %c0_100 = arith.constant 0 : index
    %267 = vector.load %arg3[%c208, %c0_100] : memref<256x32xbf16, #tpu.memory_space<vmem>>, vector<32x16xbf16>
    %c240 = arith.constant 240 : index
    %c0_101 = arith.constant 0 : index
    %268 = vector.load %arg3[%c240, %c0_101] : memref<256x32xbf16, #tpu.memory_space<vmem>>, vector<1x16xbf16>
    %269 = arith.extf %268 : vector<1x16xbf16> to vector<1x16xf32>
    %270 = arith.truncf %266 : vector<8x32xf32> to vector<8x32xbf16>
    %cst_102 = arith.constant dense<0.000000e+00> : vector<8x16xf32>
    %271 = tpu.matmul %270, %267, %cst_102 {dimension_numbers = #tpu.dot_dimension_numbers<[1], [0], [0], [1], [0, 0, 1, 1], [], []>} : vector<8x32xbf16>, vector<32x16xbf16>, vector<8x16xf32> -> vector<8x16xf32>
    %272 = vector.broadcast %269 : vector<1x16xf32> to vector<8x16xf32>
    %273 = arith.addf %271, %272 : vector<8x16xf32>
    %274 = vector.extract_strided_slice %273 {offsets = [0, 0], sizes = [8, 4], strides = [1, 1]} : vector<8x16xf32> to vector<8x4xf32>
    %275 = vector.extract_strided_slice %273 {offsets = [0, 4], sizes = [8, 4], strides = [1, 1]} : vector<8x16xf32> to vector<8x4xf32>
    %276 = vector.extract_strided_slice %273 {offsets = [0, 8], sizes = [8, 2], strides = [1, 1]} : vector<8x16xf32> to vector<8x2xf32>
    %277 = vector.extract_strided_slice %273 {offsets = [0, 10], sizes = [8, 3], strides = [1, 1]} : vector<8x16xf32> to vector<8x3xf32>
    %278 = vector.extract_strided_slice %273 {offsets = [0, 13], sizes = [8, 3], strides = [1, 1]} : vector<8x16xf32> to vector<8x3xf32>
    %279 = vector.extract_strided_slice %2 {offsets = [0, 0], sizes = [8, 4], strides = [1, 1]} : vector<8x16xf32> to vector<8x4xf32>
    %280 = vector.extract_strided_slice %2 {offsets = [0, 8], sizes = [8, 2], strides = [1, 1]} : vector<8x16xf32> to vector<8x2xf32>
    %281 = vector.extract_strided_slice %2 {offsets = [0, 10], sizes = [8, 3], strides = [1, 1]} : vector<8x16xf32> to vector<8x3xf32>
    %282 = vector.extract_strided_slice %2 {offsets = [0, 13], sizes = [8, 3], strides = [1, 1]} : vector<8x16xf32> to vector<8x3xf32>
    %283 = arith.subf %279, %274 : vector<8x4xf32>
    %cst_103 = arith.constant 0.000000e+00 : f32
    %284 = vector.broadcast %cst_103 : f32 to vector<8x4xf32>
    %285 = arith.subf %284, %275 : vector<8x4xf32>
    %cst_104 = arith.constant 0.918938517 : f32
    %286 = vector.broadcast %cst_104 : f32 to vector<8x4xf32>
    %287 = arith.subf %285, %286 : vector<8x4xf32>
    %cst_105 = arith.constant 5.000000e-01 : f32
    %288 = vector.broadcast %cst_105 : f32 to vector<8x4xf32>
    %289 = arith.mulf %288, %283 : vector<8x4xf32>
    %290 = arith.mulf %289, %283 : vector<8x4xf32>
    %cst_106 = arith.constant -2.000000e+00 : f32
    %291 = vector.broadcast %cst_106 : f32 to vector<8x4xf32>
    %292 = arith.mulf %291, %275 : vector<8x4xf32>
    %293 = math.exp %292 : vector<8x4xf32>
    %294 = arith.mulf %290, %293 : vector<8x4xf32>
    %295 = arith.subf %287, %294 : vector<8x4xf32>
    %cst_107 = arith.constant dense<0.000000e+00> : vector<8xf32>
    %296 = vector.multi_reduction <add>, %295, %cst_107 [1] : vector<8x4xf32> to vector<8xf32>
    %297 = vector.shape_cast %296 : vector<8xf32> to vector<8x1xf32>
    %cst_108 = arith.constant 0.000000e+00 : f32
    %298 = vector.broadcast %cst_108 : f32 to vector<8x2xf32>
    %299 = arith.subf %298, %276 : vector<8x2xf32>
    %cst_109 = arith.constant 0.000000e+00 : f32
    %300 = vector.broadcast %cst_109 : f32 to vector<8x2xf32>
    %301 = arith.maximumf %299, %300 : vector<8x2xf32>
    %302 = math.absf %299 : vector<8x2xf32>
    %cst_110 = arith.constant 0.000000e+00 : f32
    %303 = vector.broadcast %cst_110 : f32 to vector<8x2xf32>
    %304 = arith.subf %303, %302 : vector<8x2xf32>
    %305 = math.exp %304 : vector<8x2xf32>
    %cst_111 = arith.constant 1.000000e+00 : f32
    %306 = vector.broadcast %cst_111 : f32 to vector<8x2xf32>
    %307 = arith.addf %306, %305 : vector<8x2xf32>
    %308 = math.log %307 : vector<8x2xf32>
    %309 = arith.addf %301, %308 : vector<8x2xf32>
    %310 = arith.mulf %280, %309 : vector<8x2xf32>
    %cst_112 = arith.constant 1.000000e+00 : f32
    %311 = vector.broadcast %cst_112 : f32 to vector<8x2xf32>
    %312 = arith.subf %311, %280 : vector<8x2xf32>
    %cst_113 = arith.constant 0.000000e+00 : f32
    %313 = vector.broadcast %cst_113 : f32 to vector<8x2xf32>
    %314 = arith.maximumf %276, %313 : vector<8x2xf32>
    %315 = math.absf %276 : vector<8x2xf32>
    %cst_114 = arith.constant 0.000000e+00 : f32
    %316 = vector.broadcast %cst_114 : f32 to vector<8x2xf32>
    %317 = arith.subf %316, %315 : vector<8x2xf32>
    %318 = math.exp %317 : vector<8x2xf32>
    %cst_115 = arith.constant 1.000000e+00 : f32
    %319 = vector.broadcast %cst_115 : f32 to vector<8x2xf32>
    %320 = arith.addf %319, %318 : vector<8x2xf32>
    %321 = math.log %320 : vector<8x2xf32>
    %322 = arith.addf %314, %321 : vector<8x2xf32>
    %323 = arith.mulf %312, %322 : vector<8x2xf32>
    %324 = arith.addf %310, %323 : vector<8x2xf32>
    %cst_116 = arith.constant dense<0.000000e+00> : vector<8xf32>
    %325 = vector.multi_reduction <add>, %324, %cst_116 [1] : vector<8x2xf32> to vector<8xf32>
    %326 = vector.shape_cast %325 : vector<8xf32> to vector<8x1xf32>
    %cst_117 = arith.constant 0.000000e+00 : f32
    %327 = vector.broadcast %cst_117 : f32 to vector<8x8xf32>
    %328 = arith.subf %327, %137 : vector<8x8xf32>
    %cst_118 = arith.constant 5.000000e-01 : f32
    %329 = vector.broadcast %cst_118 : f32 to vector<8x8xf32>
    %330 = arith.mulf %329, %1 : vector<8x8xf32>
    %331 = arith.mulf %330, %1 : vector<8x8xf32>
    %332 = arith.subf %328, %331 : vector<8x8xf32>
    %cst_119 = arith.constant 5.000000e-01 : f32
    %333 = vector.broadcast %cst_119 : f32 to vector<8x8xf32>
    %334 = arith.mulf %333, %140 : vector<8x8xf32>
    %335 = arith.mulf %334, %140 : vector<8x8xf32>
    %336 = arith.addf %332, %335 : vector<8x8xf32>
    %cst_120 = arith.constant dense<0.000000e+00> : vector<8xf32>
    %337 = vector.multi_reduction <add>, %336, %cst_120 [1] : vector<8x8xf32> to vector<8xf32>
    %338 = vector.shape_cast %337 : vector<8xf32> to vector<8x1xf32>
    %cst_121 = arith.constant dense<0xFF800000> : vector<8xf32>
    %339 = vector.multi_reduction <maximumf>, %277, %cst_121 [1] : vector<8x3xf32> to vector<8xf32>
    %340 = vector.shape_cast %339 : vector<8xf32> to vector<8x1xf32>
    %341 = vector.broadcast %340 : vector<8x1xf32> to vector<8x3xf32>
    %342 = arith.subf %277, %341 : vector<8x3xf32>
    %343 = math.exp %342 : vector<8x3xf32>
    %cst_122 = arith.constant dense<0.000000e+00> : vector<8xf32>
    %344 = vector.multi_reduction <add>, %343, %cst_122 [1] : vector<8x3xf32> to vector<8xf32>
    %345 = vector.shape_cast %344 : vector<8xf32> to vector<8x1xf32>
    %346 = math.log %345 : vector<8x1xf32>
    %347 = arith.addf %346, %340 : vector<8x1xf32>
    %348 = arith.mulf %277, %281 : vector<8x3xf32>
    %cst_123 = arith.constant dense<0.000000e+00> : vector<8xf32>
    %349 = vector.multi_reduction <add>, %348, %cst_123 [1] : vector<8x3xf32> to vector<8xf32>
    %350 = vector.shape_cast %349 : vector<8xf32> to vector<8x1xf32>
    %351 = arith.subf %347, %350 : vector<8x1xf32>
    %cst_124 = arith.constant dense<0xFF800000> : vector<8xf32>
    %352 = vector.multi_reduction <maximumf>, %278, %cst_124 [1] : vector<8x3xf32> to vector<8xf32>
    %353 = vector.shape_cast %352 : vector<8xf32> to vector<8x1xf32>
    %354 = vector.broadcast %353 : vector<8x1xf32> to vector<8x3xf32>
    %355 = arith.subf %278, %354 : vector<8x3xf32>
    %356 = math.exp %355 : vector<8x3xf32>
    %cst_125 = arith.constant dense<0.000000e+00> : vector<8xf32>
    %357 = vector.multi_reduction <add>, %356, %cst_125 [1] : vector<8x3xf32> to vector<8xf32>
    %358 = vector.shape_cast %357 : vector<8xf32> to vector<8x1xf32>
    %359 = math.log %358 : vector<8x1xf32>
    %360 = arith.addf %359, %353 : vector<8x1xf32>
    %361 = arith.mulf %278, %282 : vector<8x3xf32>
    %cst_126 = arith.constant dense<0.000000e+00> : vector<8xf32>
    %362 = vector.multi_reduction <add>, %361, %cst_126 [1] : vector<8x3xf32> to vector<8xf32>
    %363 = vector.shape_cast %362 : vector<8xf32> to vector<8x1xf32>
    %364 = arith.subf %360, %363 : vector<8x1xf32>
    %365 = arith.addf %351, %364 : vector<8x1xf32>
    %366 = arith.subf %338, %297 : vector<8x1xf32>
    %cst_127 = arith.constant 1.250000e-01 : f32
    %367 = vector.broadcast %cst_127 : f32 to vector<8x1xf32>
    %368 = arith.mulf %366, %367 : vector<8x1xf32>
    %cst_128 = arith.constant 0.00999999977 : f32
    %369 = vector.broadcast %cst_128 : f32 to vector<8x1xf32>
    %370 = arith.mulf %369, %326 : vector<8x1xf32>
    %371 = arith.addf %368, %370 : vector<8x1xf32>
    %cst_129 = arith.constant 0.00999999977 : f32
    %372 = vector.broadcast %cst_129 : f32 to vector<8x1xf32>
    %373 = arith.mulf %372, %365 : vector<8x1xf32>
    %374 = arith.addf %371, %373 : vector<8x1xf32>
    %cst_130 = arith.constant dense<0.000000e+00> : vector<1xf32>
    %375 = vector.multi_reduction <add>, %374, %cst_130 [0] : vector<8x1xf32> to vector<1xf32>
    %376 = vector.shape_cast %375 : vector<1xf32> to vector<1x1xf32>
    %c0_131 = arith.constant 0 : index
    %c0_132 = arith.constant 0 : index
    %377 = vector.load %arg4[%c0_131, %c0_132] : memref<1x1xf32, #tpu.memory_space<vmem>>, vector<1x1xf32>
    tpu.vector_store %arg4[%c0_131, %c0_132], %376 {strides = array<i32>} : memref<1x1xf32, #tpu.memory_space<vmem>>, vector<1x1xf32>,
    return
  }
}

</mosaic_0001>

<llo_original>
// kernel: tpu_custom_call.1
$region0: #{tpu_custom_call.1}
  #allocation0 [shape = 'u32[]', space=smem, size = 0x4, offset = 0x4, fixed_abs, tag = 'smem constant byte address 0x4 - core index']
  #allocation1 [shape = 'u32[144,128]{1,0:T(1,128)}', space=vmem, size = 0x12000, scoped, tag = 'internal scratch']
  %s0 = inlined_call_operand.vmem [shape: f32[8,12], index: 0, kind: input, shape index: {}]
  %s1 = inlined_call_operand.vmem [shape: f32[8,8], index: 1, kind: input, shape index: {}]
  %s2 = inlined_call_operand.vmem [shape: f32[8,16], index: 2, kind: input, shape index: {}]
  %s3 = inlined_call_operand.vmem [shape: bf16[256,32], index: 3, kind: input, shape index: {}]
  %s4 = inlined_call_operand.hbm [shape: f32[1,1], index: 4, kind: output, shape index: {}]
  %s5 = sld [smem:[#allocation0]]
  $region26: #{tpu_custom_call.1} parent=0
    _
  %s7 = ssub.s32 1, %s5
  %s8 = scalar_select 0, %s7, %s5
  $region1: #{tpu_custom_call.1} parent=0
    #allocation2 [shape = 'u8[512]{0}', space=vmem, size = 0x400, scoped, tag = 'output window, operand 0, single buffered']
    #allocation3 [shape = 's32[1]{0}', space=sflag, size = 0x4, scoped, tag = 'scoped memory for tpu_custom_call.1']
    %9 = vsyncpa [#allocation3], 0
    // Predicated region
    $region2: #{tpu_custom_call.1} parent=1 // pred_check
      _
    $region3: #{tpu_custom_call.1} parent=1 // pred_check_branch
      %11 = sbr.rel (0) target = $region5
    $region4: #{tpu_custom_call.1} parent=1 // pred_region
      _
    $region5: #{tpu_custom_call.1} parent=1 // pred_fallthru
      _
    // Predicated region
    $region6: #{tpu_custom_call.1} parent=1 // pred_check
      _
    $region7: #{tpu_custom_call.1} parent=1 // pred_check_branch
      %13 = sbr.rel (0) target = $region9
    $region8: #{tpu_custom_call.1} parent=1 // pred_region
      _
    $region9: #{tpu_custom_call.1} parent=1 // pred_fallthru
      _
    // Predicated region
    $region10: #{tpu_custom_call.1} parent=1 // pred_check
      _
    $region11: #{tpu_custom_call.1} parent=1 // pred_check_branch
      %15 = sbr.rel (0) target = $region13
    $region12: #{tpu_custom_call.1} parent=1 // pred_region
      _
    $region13: #{tpu_custom_call.1} parent=1 // pred_fallthru
      _
    // Predicated region
    $region14: #{tpu_custom_call.1} parent=1 // pred_check
      _
    $region15: #{tpu_custom_call.1} parent=1 // pred_check_branch
      %17 = sbr.rel (0) target = $region17
    $region16: #{tpu_custom_call.1} parent=1 // pred_region
      _
    $region17: #{tpu_custom_call.1} parent=1 // pred_fallthru
      _
    %v19 = vld [vmem:[%s0] sm:$0xff]
    %v20 = vld [vmem:[%s1] sm:$0xff]
    %v21 = vld [vmem:[%s2] sm:$0xff]
    %v22 = vld [vmem:[%s3] sm:$0xf]
    %v23 = vld [vmem:[%s3 + $0x4] sm:$0x3]
    %v24 = vld [vmem:[%s3 + $0x8] sm:$0x1]
    %v25 = vunpack.c.l.bf16 %v24
    %v26 = vpack.c.bf16 %v19, %v19
    %v27 = vlaneseq
    %v28 = vshrl.u32 %v27, 7
    %v29 = vsub.s32 0, %v28
    %v30 = vrot.slane %v25, %v29
    %v33 = vunpack.c.l.b16 %v22
    %v34 = vunpack.c.l.b16 %v23
    %v35 = vpack.c.b16 %v34, %v33
    %vm36 = vcmask 97280
    %v38 = vsel %vm36, %v26, 0
    %vm40 = vcmask 1045504
    %v42 = vsel %vm40, %v35, 0
    %44 = vmatprep.subr.bf16.mxu0 0
    %45 = vmatpush1.bf16.msra.mxu0 %v42
    %46 = vmatprep.subr.bf16.mxu0 0
    %47 = vmatpush1.bf16.msra.mxu0 0
    %48 = vmatprep.subr.bf16.mxu0 0
    %49 = vmatpush1.bf16.msra.mxu0 0
    %50 = vmatprep.subr.bf16.mxu0 0
    %51 = vmatpush1.bf16.msra.mxu0 0
    %52 = vmatprep.subr.bf16.mxu0 0
    %53 = vmatpush1.bf16.msra.mxu0 0
    %54 = vmatprep.subr.bf16.mxu0 0
    %55 = vmatpush1.bf16.msra.mxu0 0
    %56 = vmatprep.subr.bf16.mxu0 0
    %57 = vmatpush1.bf16.msra.mxu0 0
    %58 = vmatprep.subr.bf16.mxu0 0
    %59 = vmatpush1.bf16.msra.mxu0 0
    %60 = vmatprep.subr.bf16.mxu0 0
    %61 = vmatpush1.bf16.msra.mxu0 0
    %62 = vmatprep.subr.bf16.mxu0 0
    %63 = vmatpush1.bf16.msra.mxu0 0
    %64 = vmatprep.subr.bf16.mxu0 0
    %65 = vmatpush1.bf16.msra.mxu0 0
    %66 = vmatprep.subr.bf16.mxu0 0
    %67 = vmatpush1.bf16.msra.mxu0 0
    %68 = vmatprep.subr.bf16.mxu0 0
    %69 = vmatpush1.bf16.msra.mxu0 0
    %70 = vmatprep.subr.bf16.mxu0 0
    %71 = vmatpush1.bf16.msra.mxu0 0
    %72 = vmatprep.subr.bf16.mxu0 0
    %73 = vmatpush1.bf16.msra.mxu0 0
    %74 = vmatprep.subr.bf16.mxu0 0
    %75 = vmatpush1.bf16.msra.mxu0 0
    %76 = vmatprep.mubr.bf16.mxu0 0
    %77 = vmatmul.mubr.bf16.gmra.mrb[0].mxu0 %v38
    %v78 = vpop.f32.mrb[0].mxu0
    %v79 = vadd.f32 %v30, %v78
    %v80 = vpop.f32.mrb[0].mxu0
    %v81 = vpop.f32.mrb[0].mxu0
    %v82 = vpop.f32.mrb[0].mxu0
    %83 = vdwg.mxu0
    %vm84 = vcmask 261120
    %v85 = vsel %vm84, %v79, 0.0
    %86 = vadd.xlane.f32.xlu0 %v85
    %v87 = vpop.xlane.xlu0 %86
    %v88 = vrcp.pop 32.0
    %v89 = vmul.f32 %v87, %v88
    %v90 = vsub.f32 %v79, %v89
    %v91 = vmul.f32 %v90, %v90
    %v92 = vsel %vm84, %v91, 0.0
    %93 = vadd.xlane.f32.xlu0 %v92
    %v94 = vpop.xlane.xlu0 %93
    %v95 = vmul.f32 %v94, %v88
    %v96 = vadd.f32 %v95, 1e-05
    %v97 = vrsqrt.pop %v96
    %v98 = vmul.f32 %v90, %v97
    %v99 = vmul.f32 %v98, 0.5
    %v100 = vmul.f32 %v98, 0.70710677
    %v101 = vand.u32 2147483647, %v100
    %v102 = vmul.f32 %v101, 0.3275911
    %v103 = vadd.f32 %v102, 1.0
    %v104 = vrcp.pop %v103
    %v105 = vmul.f32 1.0, %v104
    %v106 = vmul.f32 %v105, 1.0614054
    %v107 = vadd.f32 %v106, -1.4531521
    %v108 = vmul.f32 %v107, %v105
    %v109 = vadd.f32 %v108, 1.4214138
    %v110 = vmul.f32 %v109, %v105
    %v111 = vadd.f32 %v110, -0.28449672
    %v112 = vmul.f32 %v111, %v105
    %v113 = vadd.f32 %v112, 0.2548296
    %v114 = vmul.f32 %v113, %v105
    %v115 = vsub.f32 0.0, %v101
    %v116 = vmul.f32 %v115, %v101
    %v117 = vmul.f32 %v116, 1.442695
    %v118 = vpow.pop %v117
    %v119 = vmul.f32 %v114, %v118
    %v120 = vsub.f32 1.0, %v119
    %vm121 = vcmp.ge.f32.partialorder %v100, 0.0
    %v122 = vsub.f32 0.0, %v120
    %v123 = vsel %vm121, %v120, %v122
    %v124 = vadd.f32 %v123, 1.0
    %v125 = vmul.f32 %v99, %v124
    %v126 = vld [vmem:[%s3 + $0x10] sm:$0xf]
    %v127 = vld [vmem:[%s3 + $0x14] sm:$0xf]
    %v128 = vld [vmem:[%s3 + $0x18] sm:$0xf]
    %v129 = vld [vmem:[%s3 + $0x1c] sm:$0xf]
    %v130 = vld [vmem:[%s3 + $0x20] sm:$0x1]
    %v131 = vunpack.c.l.bf16 %v130
    %v132 = vpack.c.bf16 %v125, %v125
    %v133 = vlaneseq
    %v134 = vshrl.u32 %v133, 7
    %v135 = vsub.s32 0, %v134
    %v136 = vrot.slane %v131, %v135
    %v141 = vunpack.c.l.b16 %v126
    %v142 = vunpack.c.l.b16 %v127
    %v143 = vunpack.c.l.b16 %v128
    %v144 = vunpack.c.l.b16 %v129
    %v145 = vpack.c.b16 %v142, %v141
    %v146 = vpack.c.b16 %v144, %v143
    %v150 = vsel %vm84, %v132, 0
    %152 = vmatprep.subr.bf16.mxu0 0
    %153 = vmatpush1.bf16.msra.mxu0 %v145
    %154 = vmatprep.subr.bf16.mxu0 0
    %155 = vmatpush1.bf16.msra.mxu0 %v146
    %156 = vmatprep.subr.bf16.mxu0 0
    %157 = vmatpush1.bf16.msra.mxu0 0
    %158 = vmatprep.subr.bf16.mxu0 0
    %159 = vmatpush1.bf16.msra.mxu0 0
    %160 = vmatprep.subr.bf16.mxu0 0
    %161 = vmatpush1.bf16.msra.mxu0 0
    %162 = vmatprep.subr.bf16.mxu0 0
    %163 = vmatpush1.bf16.msra.mxu0 0
    %164 = vmatprep.subr.bf16.mxu0 0
    %165 = vmatpush1.bf16.msra.mxu0 0
    %166 = vmatprep.subr.bf16.mxu0 0
    %167 = vmatpush1.bf16.msra.mxu0 0
    %168 = vmatprep.subr.bf16.mxu0 0
    %169 = vmatpush1.bf16.msra.mxu0 0
    %170 = vmatprep.subr.bf16.mxu0 0
    %171 = vmatpush1.bf16.msra.mxu0 0
    %172 = vmatprep.subr.bf16.mxu0 0
    %173 = vmatpush1.bf16.msra.mxu0 0
    %174 = vmatprep.subr.bf16.mxu0 0
    %175 = vmatpush1.bf16.msra.mxu0 0
    %176 = vmatprep.subr.bf16.mxu0 0
    %177 = vmatpush1.bf16.msra.mxu0 0
    %178 = vmatprep.subr.bf16.mxu0 0
    %179 = vmatpush1.bf16.msra.mxu0 0
    %180 = vmatprep.subr.bf16.mxu0 0
    %181 = vmatpush1.bf16.msra.mxu0 0
    %182 = vmatprep.subr.bf16.mxu0 0
    %183 = vmatpush1.bf16.msra.mxu0 0
    %184 = vmatprep.mubr.bf16.mxu0 0
    %185 = vmatmul.mubr.bf16.gmra.mrb[0].mxu0 %v150
    %v186 = vpop.f32.mrb[0].mxu0
    %v187 = vadd.f32 %v136, %v186
    %v188 = vpop.f32.mrb[0].mxu0
    %v189 = vpop.f32.mrb[0].mxu0
    %v190 = vpop.f32.mrb[0].mxu0
    %191 = vdwg.mxu0
    %v192 = vsel %vm84, %v187, 0.0
    %193 = vadd.xlane.f32.xlu0 %v192
    %v194 = vpop.xlane.xlu0 %193
    %v195 = vmul.f32 %v194, %v88
    %v196 = vsub.f32 %v187, %v195
    %v197 = vmul.f32 %v196, %v196
    %v198 = vsel %vm84, %v197, 0.0
    %199 = vadd.xlane.f32.xlu0 %v198
    %v200 = vpop.xlane.xlu0 %199
    %v201 = vmul.f32 %v200, %v88
    %v202 = vadd.f32 %v201, 1e-05
    %v203 = vrsqrt.pop %v202
    %v204 = vmul.f32 %v196, %v203
    %v205 = vmul.f32 %v204, 0.5
    %v206 = vmul.f32 %v204, 0.70710677
    %v207 = vand.u32 2147483647, %v206
    %v208 = vmul.f32 %v207, 0.3275911
    %v209 = vadd.f32 %v208, 1.0
    %v210 = vrcp.pop %v209
    %v211 = vmul.f32 1.0, %v210
    %v212 = vmul.f32 %v211, 1.0614054
    %v213 = vadd.f32 %v212, -1.4531521
    %v214 = vmul.f32 %v213, %v211
    %v215 = vadd.f32 %v214, 1.4214138
    %v216 = vmul.f32 %v215, %v211
    %v217 = vadd.f32 %v216, -0.28449672
    %v218 = vmul.f32 %v217, %v211
    %v219 = vadd.f32 %v218, 0.2548296
    %v220 = vmul.f32 %v219, %v211
    %v221 = vsub.f32 0.0, %v207
    %v222 = vmul.f32 %v221, %v207
    %v223 = vmul.f32 %v222, 1.442695
    %v224 = vpow.pop %v223
    %v225 = vmul.f32 %v220, %v224
    %v226 = vsub.f32 1.0, %v225
    %vm227 = vcmp.ge.f32.partialorder %v206, 0.0
    %v228 = vsub.f32 0.0, %v226
    %v229 = vsel %vm227, %v226, %v228
    %v230 = vadd.f32 %v229, 1.0
    %v231 = vmul.f32 %v205, %v230
    %v232 = vld [vmem:[%s3 + $0x28] sm:$0xf]
    %v233 = vld [vmem:[%s3 + $0x2c] sm:$0xf]
    %v234 = vld [vmem:[%s3 + $0x30] sm:$0xf]
    %v235 = vld [vmem:[%s3 + $0x34] sm:$0xf]
    %v236 = vld [vmem:[%s3 + $0x38] sm:$0x1]
    %v237 = vunpack.c.l.bf16 %v236
    %v238 = vpack.c.bf16 %v231, %v231
    %v239 = vlaneseq
    %v240 = vshrl.u32 %v239, 7
    %v241 = vsub.s32 0, %v240
    %v242 = vrot.slane %v237, %v241
    %v247 = vunpack.c.l.b16 %v232
    %v248 = vunpack.c.l.b16 %v233
    %v249 = vunpack.c.l.b16 %v234
    %v250 = vunpack.c.l.b16 %v235
    %v251 = vpack.c.b16 %v248, %v247
    %v252 = vpack.c.b16 %v250, %v249
    %v256 = vsel %vm84, %v238, 0
    %258 = vmatprep.subr.bf16.mxu0 0
    %259 = vmatpush1.bf16.msra.mxu0 %v251
    %260 = vmatprep.subr.bf16.mxu0 0
    %261 = vmatpush1.bf16.msra.mxu0 %v252
    %262 = vmatprep.subr.bf16.mxu0 0
    %263 = vmatpush1.bf16.msra.mxu0 0
    %264 = vmatprep.subr.bf16.mxu0 0
    %265 = vmatpush1.bf16.msra.mxu0 0
    %266 = vmatprep.subr.bf16.mxu0 0
    %267 = vmatpush1.bf16.msra.mxu0 0
    %268 = vmatprep.subr.bf16.mxu0 0
    %269 = vmatpush1.bf16.msra.mxu0 0
    %270 = vmatprep.subr.bf16.mxu0 0
    %271 = vmatpush1.bf16.msra.mxu0 0
    %272 = vmatprep.subr.bf16.mxu0 0
    %273 = vmatpush1.bf16.msra.mxu0 0
    %274 = vmatprep.subr.bf16.mxu0 0
    %275 = vmatpush1.bf16.msra.mxu0 0
    %276 = vmatprep.subr.bf16.mxu0 0
    %277 = vmatpush1.bf16.msra.mxu0 0
    %278 = vmatprep.subr.bf16.mxu0 0
    %279 = vmatpush1.bf16.msra.mxu0 0
    %280 = vmatprep.subr.bf16.mxu0 0
    %281 = vmatpush1.bf16.msra.mxu0 0
    %282 = vmatprep.subr.bf16.mxu0 0
    %283 = vmatpush1.bf16.msra.mxu0 0
    %284 = vmatprep.subr.bf16.mxu0 0
    %285 = vmatpush1.bf16.msra.mxu0 0
    %286 = vmatprep.subr.bf16.mxu0 0
    %287 = vmatpush1.bf16.msra.mxu0 0
    %288 = vmatprep.subr.bf16.mxu0 0
    %289 = vmatpush1.bf16.msra.mxu0 0
    %290 = vmatprep.mubr.bf16.mxu0 0
    %291 = vmatmul.mubr.bf16.gmra.mrb[0].mxu0 %v256
    %v292 = vpop.f32.mrb[0].mxu0
    %v293 = vadd.f32 %v242, %v292
    %v294 = vpop.f32.mrb[0].mxu0
    %v295 = vpop.f32.mrb[0].mxu0
    %v296 = vpop.f32.mrb[0].mxu0
    %297 = vdwg.mxu0
    %v298 = vmul.f32 %v293, 1.442695
    %v299 = vpow.pop %v298
    %301 = vrot.lane.b32.xlu0 %v20, 8
    %v302 = vpop.permute.xlu0 %301
    %v304 = vmul.f32 %v299, %v302
    %306 = vrot.lane.b32.xlu0 %v304, 120
    %v307 = vpop.permute.xlu0 %306
    %v309 = vadd.f32 %v293, %v307
    %v310 = vld [vmem:[%s3 + $0x40] sm:$0xf]
    %v311 = vld [vmem:[%s3 + $0x48] sm:$0x1]
    %v312 = vunpack.c.l.bf16 %v311
    %v313 = vpack.c.bf16 %v309, %v309
    %v314 = vlaneseq
    %v315 = vshrl.u32 %v314, 7
    %v316 = vsub.s32 0, %v315
    %v317 = vrot.slane %v312, %v316
    %vm318 = vcmask 64512
    %v320 = vsel %vm318, %v313, 0
    %vm322 = vcmask 1043456
    %v324 = vsel %vm322, %v310, 0
    %326 = vmatprep.subr.bf16.mxu0 0
    %327 = vmatpush1.bf16.msra.mxu0 %v324
    %328 = vmatprep.subr.bf16.mxu0 0
    %329 = vmatpush1.bf16.msra.mxu0 0
    %330 = vmatprep.subr.bf16.mxu0 0
    %331 = vmatpush1.bf16.msra.mxu0 0
    %332 = vmatprep.subr.bf16.mxu0 0
    %333 = vmatpush1.bf16.msra.mxu0 0
    %334 = vmatprep.subr.bf16.mxu0 0
    %335 = vmatpush1.bf16.msra.mxu0 0
    %336 = vmatprep.subr.bf16.mxu0 0
    %337 = vmatpush1.bf16.msra.mxu0 0
    %338 = vmatprep.subr.bf16.mxu0 0
    %339 = vmatpush1.bf16.msra.mxu0 0
    %340 = vmatprep.subr.bf16.mxu0 0
    %341 = vmatpush1.bf16.msra.mxu0 0
    %342 = vmatprep.subr.bf16.mxu0 0
    %343 = vmatpush1.bf16.msra.mxu0 0
    %344 = vmatprep.subr.bf16.mxu0 0
    %345 = vmatpush1.bf16.msra.mxu0 0
    %346 = vmatprep.subr.bf16.mxu0 0
    %347 = vmatpush1.bf16.msra.mxu0 0
    %348 = vmatprep.subr.bf16.mxu0 0
    %349 = vmatpush1.bf16.msra.mxu0 0
    %350 = vmatprep.subr.bf16.mxu0 0
    %351 = vmatpush1.bf16.msra.mxu0 0
    %352 = vmatprep.subr.bf16.mxu0 0
    %353 = vmatpush1.bf16.msra.mxu0 0
    %354 = vmatprep.subr.bf16.mxu0 0
    %355 = vmatpush1.bf16.msra.mxu0 0
    %356 = vmatprep.subr.bf16.mxu0 0
    %357 = vmatpush1.bf16.msra.mxu0 0
    %358 = vmatprep.mubr.bf16.mxu0 0
    %359 = vmatmul.mubr.bf16.gmra.mrb[0].mxu0 %v320
    %v360 = vpop.f32.mrb[0].mxu0
    %v361 = vadd.f32 %v317, %v360
    %v362 = vpop.f32.mrb[0].mxu0
    %v363 = vpop.f32.mrb[0].mxu0
    %v364 = vpop.f32.mrb[0].mxu0
    %365 = vdwg.mxu0
    %v366 = vsel %vm84, %v361, 0.0
    %367 = vadd.xlane.f32.xlu0 %v366
    %v368 = vpop.xlane.xlu0 %367
    %v369 = vmul.f32 %v368, %v88
    %v370 = vsub.f32 %v361, %v369
    %v371 = vmul.f32 %v370, %v370
    %v372 = vsel %vm84, %v371, 0.0
    %373 = vadd.xlane.f32.xlu0 %v372
    %v374 = vpop.xlane.xlu0 %373
    %v375 = vmul.f32 %v374, %v88
    %v376 = vadd.f32 %v375, 1e-05
    %v377 = vrsqrt.pop %v376
    %v378 = vmul.f32 %v370, %v377
    %v379 = vmul.f32 %v378, 0.5
    %v380 = vmul.f32 %v378, 0.70710677
    %v381 = vand.u32 2147483647, %v380
    %v382 = vmul.f32 %v381, 0.3275911
    %v383 = vadd.f32 %v382, 1.0
    %v384 = vrcp.pop %v383
    %v385 = vmul.f32 1.0, %v384
    %v386 = vmul.f32 %v385, 1.0614054
    %v387 = vadd.f32 %v386, -1.4531521
    %v388 = vmul.f32 %v387, %v385
    %v389 = vadd.f32 %v388, 1.4214138
    %v390 = vmul.f32 %v389, %v385
    %v391 = vadd.f32 %v390, -0.28449672
    %v392 = vmul.f32 %v391, %v385
    %v393 = vadd.f32 %v392, 0.2548296
    %v394 = vmul.f32 %v393, %v385
    %v395 = vsub.f32 0.0, %v381
    %v396 = vmul.f32 %v395, %v381
    %v397 = vmul.f32 %v396, 1.442695
    %v398 = vpow.pop %v397
    %v399 = vmul.f32 %v394, %v398
    %v400 = vsub.f32 1.0, %v399
    %vm401 = vcmp.ge.f32.partialorder %v380, 0.0
    %v402 = vsub.f32 0.0, %v400
    %v403 = vsel %vm401, %v400, %v402
    %v404 = vadd.f32 %v403, 1.0
    %v405 = vmul.f32 %v379, %v404
    %v406 = vld [vmem:[%s3 + $0x50] sm:$0xf]
    %v407 = vld [vmem:[%s3 + $0x54] sm:$0xf]
    %v408 = vld [vmem:[%s3 + $0x58] sm:$0xf]
    %v409 = vld [vmem:[%s3 + $0x5c] sm:$0xf]
    %v410 = vld [vmem:[%s3 + $0x60] sm:$0x1]
    %v411 = vunpack.c.l.bf16 %v410
    %v412 = vpack.c.bf16 %v405, %v405
    %v413 = vlaneseq
    %v414 = vshrl.u32 %v413, 7
    %v415 = vsub.s32 0, %v414
    %v416 = vrot.slane %v411, %v415
    %v421 = vunpack.c.l.b16 %v406
    %v422 = vunpack.c.l.b16 %v407
    %v423 = vunpack.c.l.b16 %v408
    %v424 = vunpack.c.l.b16 %v409
    %v425 = vpack.c.b16 %v422, %v421
    %v426 = vpack.c.b16 %v424, %v423
    %v430 = vsel %vm84, %v412, 0
    %432 = vmatprep.subr.bf16.mxu0 0
    %433 = vmatpush1.bf16.msra.mxu0 %v425
    %434 = vmatprep.subr.bf16.mxu0 0
    %435 = vmatpush1.bf16.msra.mxu0 %v426
    %436 = vmatprep.subr.bf16.mxu0 0
    %437 = vmatpush1.bf16.msra.mxu0 0
    %438 = vmatprep.subr.bf16.mxu0 0
    %439 = vmatpush1.bf16.msra.mxu0 0
    %440 = vmatprep.subr.bf16.mxu0 0
    %441 = vmatpush1.bf16.msra.mxu0 0
    %442 = vmatprep.subr.bf16.mxu0 0
    %443 = vmatpush1.bf16.msra.mxu0 0
    %444 = vmatprep.subr.bf16.mxu0 0
    %445 = vmatpush1.bf16.msra.mxu0 0
    %446 = vmatprep.subr.bf16.mxu0 0
    %447 = vmatpush1.bf16.msra.mxu0 0
    %448 = vmatprep.subr.bf16.mxu0 0
    %449 = vmatpush1.bf16.msra.mxu0 0
    %450 = vmatprep.subr.bf16.mxu0 0
    %451 = vmatpush1.bf16.msra.mxu0 0
    %452 = vmatprep.subr.bf16.mxu0 0
    %453 = vmatpush1.bf16.msra.mxu0 0
    %454 = vmatprep.subr.bf16.mxu0 0
    %455 = vmatpush1.bf16.msra.mxu0 0
    %456 = vmatprep.subr.bf16.mxu0 0
    %457 = vmatpush1.bf16.msra.mxu0 0
    %458 = vmatprep.subr.bf16.mxu0 0
    %459 = vmatpush1.bf16.msra.mxu0 0
    %460 = vmatprep.subr.bf16.mxu0 0
    %461 = vmatpush1.bf16.msra.mxu0 0
    %462 = vmatprep.subr.bf16.mxu0 0
    %463 = vmatpush1.bf16.msra.mxu0 0
    %464 = vmatprep.mubr.bf16.mxu0 0
    %465 = vmatmul.mubr.bf16.gmra.mrb[0].mxu0 %v430
    %v466 = vpop.f32.mrb[0].mxu0
    %v467 = vadd.f32 %v416, %v466
    %v468 = vpop.f32.mrb[0].mxu0
    %v469 = vpop.f32.mrb[0].mxu0
    %v470 = vpop.f32.mrb[0].mxu0
    %471 = vdwg.mxu0
    %v472 = vsel %vm84, %v467, 0.0
    %473 = vadd.xlane.f32.xlu0 %v472
    %v474 = vpop.xlane.xlu0 %473
    %v475 = vmul.f32 %v474, %v88
    %v476 = vsub.f32 %v467, %v475
    %v477 = vmul.f32 %v476, %v476
    %v478 = vsel %vm84, %v477, 0.0
    %479 = vadd.xlane.f32.xlu0 %v478
    %v480 = vpop.xlane.xlu0 %479
    %v481 = vmul.f32 %v480, %v88
    %v482 = vadd.f32 %v481, 1e-05
    %v483 = vrsqrt.pop %v482
    %v484 = vmul.f32 %v476, %v483
    %v485 = vmul.f32 %v484, 0.5
    %v486 = vmul.f32 %v484, 0.70710677
    %v487 = vand.u32 2147483647, %v486
    %v488 = vmul.f32 %v487, 0.3275911
    %v489 = vadd.f32 %v488, 1.0
    %v490 = vrcp.pop %v489
    %v491 = vmul.f32 1.0, %v490
    %v492 = vmul.f32 %v491, 1.0614054
    %v493 = vadd.f32 %v492, -1.4531521
    %v494 = vmul.f32 %v493, %v491
    %v495 = vadd.f32 %v494, 1.4214138
    %v496 = vmul.f32 %v495, %v491
    %v497 = vadd.f32 %v496, -0.28449672
    %v498 = vmul.f32 %v497, %v491
    %v499 = vadd.f32 %v498, 0.2548296
    %v500 = vmul.f32 %v499, %v491
    %v501 = vsub.f32 0.0, %v487
    %v502 = vmul.f32 %v501, %v487
    %v503 = vmul.f32 %v502, 1.442695
    %v504 = vpow.pop %v503
    %v505 = vmul.f32 %v500, %v504
    %v506 = vsub.f32 1.0, %v505
    %vm507 = vcmp.ge.f32.partialorder %v486, 0.0
    %v508 = vsub.f32 0.0, %v506
    %v509 = vsel %vm507, %v506, %v508
    %v510 = vadd.f32 %v509, 1.0
    %v511 = vmul.f32 %v485, %v510
    %v512 = vld [vmem:[%s3 + $0x68] sm:$0xf]
    %v513 = vld [vmem:[%s3 + $0x6c] sm:$0xf]
    %v514 = vld [vmem:[%s3 + $0x70] sm:$0xf]
    %v515 = vld [vmem:[%s3 + $0x74] sm:$0xf]
    %v516 = vld [vmem:[%s3 + $0x78] sm:$0x1]
    %v517 = vunpack.c.l.bf16 %v516
    %v518 = vpack.c.bf16 %v511, %v511
    %v519 = vlaneseq
    %v520 = vshrl.u32 %v519, 7
    %v521 = vsub.s32 0, %v520
    %v522 = vrot.slane %v517, %v521
    %v527 = vunpack.c.l.b16 %v512
    %v528 = vunpack.c.l.b16 %v513
    %v529 = vunpack.c.l.b16 %v514
    %v530 = vunpack.c.l.b16 %v515
    %v531 = vpack.c.b16 %v528, %v527
    %v532 = vpack.c.b16 %v530, %v529
    %v536 = vsel %vm84, %v518, 0
    %538 = vmatprep.subr.bf16.mxu0 0
    %539 = vmatpush1.bf16.msra.mxu0 %v531
    %540 = vmatprep.subr.bf16.mxu0 0
    %541 = vmatpush1.bf16.msra.mxu0 %v532
    %542 = vmatprep.subr.bf16.mxu0 0
    %543 = vmatpush1.bf16.msra.mxu0 0
    %544 = vmatprep.subr.bf16.mxu0 0
    %545 = vmatpush1.bf16.msra.mxu0 0
    %546 = vmatprep.subr.bf16.mxu0 0
    %547 = vmatpush1.bf16.msra.mxu0 0
    %548 = vmatprep.subr.bf16.mxu0 0
    %549 = vmatpush1.bf16.msra.mxu0 0
    %550 = vmatprep.subr.bf16.mxu0 0
    %551 = vmatpush1.bf16.msra.mxu0 0
    %552 = vmatprep.subr.bf16.mxu0 0
    %553 = vmatpush1.bf16.msra.mxu0 0
    %554 = vmatprep.subr.bf16.mxu0 0
    %555 = vmatpush1.bf16.msra.mxu0 0
    %556 = vmatprep.subr.bf16.mxu0 0
    %557 = vmatpush1.bf16.msra.mxu0 0
    %558 = vmatprep.subr.bf16.mxu0 0
    %559 = vmatpush1.bf16.msra.mxu0 0
    %560 = vmatprep.subr.bf16.mxu0 0
    %561 = vmatpush1.bf16.msra.mxu0 0
    %562 = vmatprep.subr.bf16.mxu0 0
    %563 = vmatpush1.bf16.msra.mxu0 0
    %564 = vmatprep.subr.bf16.mxu0 0
    %565 = vmatpush1.bf16.msra.mxu0 0
    %566 = vmatprep.subr.bf16.mxu0 0
    %567 = vmatpush1.bf16.msra.mxu0 0
    %568 = vmatprep.subr.bf16.mxu0 0
    %569 = vmatpush1.bf16.msra.mxu0 0
    %570 = vmatprep.mubr.bf16.mxu0 0
    %571 = vmatmul.mubr.bf16.gmra.mrb[0].mxu0 %v536
    %v572 = vpop.f32.mrb[0].mxu0
    %v573 = vadd.f32 %v522, %v572
    %v574 = vpop.f32.mrb[0].mxu0
    %v575 = vpop.f32.mrb[0].mxu0
    %v576 = vpop.f32.mrb[0].mxu0
    %577 = vdwg.mxu0
    %v578 = vsub.f32 %v21, %v573
    %v579 = vsub.f32 0.0, %v573
    %v580 = vsub.f32 %v579, 0.9189385
    %v581 = vmul.f32 %v578, 0.5
    %v582 = vmul.f32 %v581, %v578
    %v583 = vmul.f32 %v573, -2.0
    %v584 = vmul.f32 %v583, 1.442695
    %v585 = vpow.pop %v584
    %587 = vrot.lane.b32.xlu0 %v585, 124
    %v588 = vpop.permute.xlu0 %587
    %v590 = vmul.f32 %v582, %v588
    %592 = vrot.lane.b32.xlu0 %v590, 4
    %v593 = vpop.permute.xlu0 %592
    %v595 = vsub.f32 %v580, %v593
    %597 = vrot.lane.b32.xlu0 %v595, 124
    %v598 = vpop.permute.xlu0 %597
    %vm600 = vcmask 31744
    %v601 = vsel %vm600, %v598, 0.0
    %602 = vadd.xlane.f32.xlu0 %v601
    %v603 = vpop.xlane.xlu0 %602
    %v604 = vmax.f32 %v579, 0.0
    %v605 = vand.u32 2147483647, %v579
    %v606 = vsub.f32 0.0, %v605
    %v607 = vmul.f32 %v606, 1.442695
    %v608 = vpow.pop %v607
    %v609 = vadd.f32 %v608, 1.0
    %v610 = vlog2.pop %v609
    %v611 = vmul.f32 %v610, 0.6931472
    %v612 = vadd.f32 %v604, %v611
    %v613 = vmul.f32 %v21, %v612
    %v614 = vsub.f32 1.0, %v21
    %v615 = vmax.f32 %v573, 0.0
    %v616 = vand.u32 2147483647, %v573
    %v617 = vsub.f32 0.0, %v616
    %v618 = vmul.f32 %v617, 1.442695
    %v619 = vpow.pop %v618
    %v620 = vadd.f32 %v619, 1.0
    %v621 = vlog2.pop %v620
    %v622 = vmul.f32 %v621, 0.6931472
    %v623 = vadd.f32 %v615, %v622
    %v624 = vmul.f32 %v614, %v623
    %v625 = vadd.f32 %v613, %v624
    %627 = vrot.lane.b32.xlu0 %v625, 120
    %v628 = vpop.permute.xlu0 %627
    %vm630 = vcmask 15360
    %v631 = vsel %vm630, %v628, 0.0
    %632 = vadd.xlane.f32.xlu0 %v631
    %v633 = vpop.xlane.xlu0 %632
    %v634 = vsub.f32 0.0, %v293
    %v635 = vmul.f32 %v20, 0.5
    %v636 = vmul.f32 %v635, %v20
    %638 = vrot.lane.b32.xlu0 %v636, 8
    %v639 = vpop.permute.xlu0 %638
    %v641 = vsub.f32 %v634, %v639
    %v642 = vmul.f32 %v309, 0.5
    %v643 = vmul.f32 %v642, %v309
    %645 = vrot.lane.b32.xlu0 %v643, 8
    %v646 = vpop.permute.xlu0 %645
    %v648 = vadd.f32 %v641, %v646
    %650 = vrot.lane.b32.xlu0 %v648, 120
    %v651 = vpop.permute.xlu0 %650
    %v653 = vsel %vm318, %v651, 0.0
    %654 = vadd.xlane.f32.xlu0 %v653
    %v655 = vpop.xlane.xlu0 %654
    %vm656 = vcmask 105552
    %v657 = vsel %vm656, %v573, -inf
    %658 = vmax.xlane.f32.xlu0 %v657
    %v659 = vpop.xlane.xlu0 %658
    %v660 = vsub.f32 %v573, %v659
    %v661 = vmul.f32 %v660, 1.442695
    %v662 = vpow.pop %v661
    %664 = vrot.lane.b32.xlu0 %v662, 118
    %v665 = vpop.permute.xlu0 %664
    %vm667 = vcmask 23552
    %v668 = vsel %vm667, %v665, 0.0
    %669 = vadd.xlane.f32.xlu0 %v668
    %v670 = vpop.xlane.xlu0 %669
    %v671 = vlog2.pop %v670
    %v672 = vmul.f32 %v671, 0.6931472
    %v673 = vadd.f32 %v672, %v659
    %v674 = vmul.f32 %v573, %v21
    %676 = vrot.lane.b32.xlu0 %v674, 118
    %v677 = vpop.permute.xlu0 %676
    %v679 = vsel %vm667, %v677, 0.0
    %680 = vadd.xlane.f32.xlu0 %v679
    %v681 = vpop.xlane.xlu0 %680
    %v682 = vsub.f32 %v673, %v681
    %vm683 = vcmask 130152
    %v684 = vsel %vm683, %v573, -inf
    %685 = vmax.xlane.f32.xlu0 %v684
    %v686 = vpop.xlane.xlu0 %685
    %v687 = vsub.f32 %v573, %v686
    %v688 = vmul.f32 %v687, 1.442695
    %v689 = vpow.pop %v688
    %691 = vrot.lane.b32.xlu0 %v689, 115
    %v692 = vpop.permute.xlu0 %691
    %v694 = vsel %vm667, %v692, 0.0
    %695 = vadd.xlane.f32.xlu0 %v694
    %v696 = vpop.xlane.xlu0 %695
    %v697 = vlog2.pop %v696
    %v698 = vmul.f32 %v697, 0.6931472
    %v699 = vadd.f32 %v698, %v686
    %700 = vrot.lane.b32.xlu0 %v674, 115
    %v701 = vpop.permute.xlu0 %700
    %v703 = vsel %vm667, %v701, 0.0
    %704 = vadd.xlane.f32.xlu0 %v703
    %v705 = vpop.xlane.xlu0 %704
    %v706 = vsub.f32 %v699, %v705
    %v707 = vadd.f32 %v682, %v706
    %v708 = vsub.f32 %v655, %v603
    %v709 = vmul.f32 %v708, 0.125
    %v710 = vmul.f32 %v633, 0.01
    %v711 = vadd.f32 %v709, %v710
    %v712 = vmul.f32 %v707, 0.01
    %v713 = vadd.f32 %v711, %v712
    %v714 = vrot.slane %v713, 4
    %v715 = vadd.f32 %v713, %v714
    %v716 = vrot.slane %v715, 2
    %v717 = vadd.f32 %v715, %v716
    %v718 = vrot.slane %v717, 1
    %v719 = vadd.f32 %v717, %v718
    %vm720 = vcmask 0
    %721 = vst.msk [vmem:[#allocation2] sm:$0x1] %vm720, %v719
    // Predicated region
    $region18: #{tpu_custom_call.1} parent=1 // pred_check
      _
    $region19: #{tpu_custom_call.1} parent=1 // pred_check_branch
      %723 = sbr.rel (0) target = $region21
    $region20: #{tpu_custom_call.1} parent=1 // pred_region
      %s725 = ssub.s32 16, 16
      %726 = vsyncadd [#allocation3], %s725
      %s728 = sshll.u32 [#allocation2], 4
      %s729 = int_to_ptr.vmem [resolvable:$true] %s728
      %731 = dma.vmem_to_hbm [thread:$0]  %s729, 16, %s4, [#allocation3]
    $region21: #{tpu_custom_call.1} parent=1 // pred_fallthru
      _
    // Predicated region
    $region22: #{tpu_custom_call.1} parent=1 // pred_check
      _
    $region23: #{tpu_custom_call.1} parent=1 // pred_check_branch
      %733 = sbr.rel (0) target = $region25
    $region24: #{tpu_custom_call.1} parent=1 // pred_region
      %734 = dma.done [#allocation3], 16
    $region25: #{tpu_custom_call.1} parent=1 // pred_fallthru
      _
    %735 = vsyncpa [#allocation3], 1

</llo_original>
